<compile_context>
chip_gen: v5e
topology: v5e:2x2
jax: 0.10.0
libtpu: 0.0.40
codegen_flags: <defaults>
</compile_context>

<pallas_src>
import functools
from typing import Dict, Optional, Union

import jax
import jax.numpy as jnp
from jax.experimental import pallas as pl
from jax.experimental.pallas import tpu as pltpu


def _round_up(x: int, m: int) -> int:
    return ((x + m - 1) // m) * m


def _embed_kernel(idx_ref, table_ref, out_ref, acc_ref, *, block_k: int):
    # idx_ref:   (block_n, 1)      int32   node ids (padding rows carry -1)
    # table_ref: (block_k, d_pad)  bf16    mask-premultiplied, zero-padded table tile
    # out_ref:   (block_n, d_pad)  f32
    # acc_ref:   (block_n, d_pad)  f32     accumulator across the K (table-row) axis
    k = pl.program_id(1)

    @pl.when(k == 0)
    def _init():
        acc_ref[...] = jnp.zeros_like(acc_ref)

    idx = idx_ref[...]                                                  # (bn, 1)
    bn = idx.shape[0]
    # Global table-row ids covered by this K tile.
    col = jax.lax.broadcasted_iota(jnp.int32, (bn, block_k), 1) + k * block_k
    # Validity (0 <= idx < num_nodes) and the per-node mask are folded into the
    # table: masked/padded rows are exactly zero, and ids that match no row
    # (negative or >= K_pad) give an all-zero one-hot row -> zero output.
    onehot = (col == idx).astype(jnp.bfloat16)                          # (bn, block_k)
    acc_ref[...] += jnp.dot(onehot, table_ref[...],
                            preferred_element_type=jnp.float32)

    @pl.when(k == pl.num_programs(1) - 1)
    def _finalize():
        out_ref[...] = acc_ref[...].astype(out_ref.dtype)


def node_embedding_forward(node_idx: jnp.ndarray,
                           packed_table: jnp.ndarray,
                           repr_dim: int,
                           block_k: int,
                           *, block_n: int = 256) -> jnp.ndarray:
    """Forward for one node type. `packed_table` is (K_pad, D_pad) bf16."""
    k_pad, d_pad = packed_table.shape
    assert k_pad % block_k == 0 and d_pad % 128 == 0

    n = int(node_idx.shape[0])
    n_pad = _round_up(max(n, 1), block_n)
    # Pad with -1: matches no table row -> zero output rows, sliced off below.
    # Keeping idx as (n, 1) puts the ids in the sublane dim, which broadcasts for
    # free across the lane (table-row) dim of the one-hot.
    idx = jnp.full((n_pad, 1), -1, dtype=jnp.int32)
    idx = idx.at[:n, 0].set(node_idx.astype(jnp.int32))

    grid = (n_pad // block_n, k_pad // block_k)
    kernel = functools.partial(_embed_kernel, block_k=block_k)

    out = pl.pallas_call(
        kernel,
        out_shape=jax.ShapeDtypeStruct((n_pad, d_pad), jnp.float32),
        grid_spec=pltpu.PrefetchScalarGridSpec(
            num_scalar_prefetch=0,
            grid=grid,
            in_specs=[
                pl.BlockSpec((block_n, 1), lambda i, k: (i, 0)),        # ids
                pl.BlockSpec((block_k, d_pad), lambda i, k: (k, 0)),    # table K tile
            ],
            out_specs=pl.BlockSpec((block_n, d_pad), lambda i, k: (i, 0)),
            scratch_shapes=[pltpu.VMEM((block_n, d_pad), jnp.float32)],
        ),
        compiler_params=pltpu.CompilerParams(
            dimension_semantics=("parallel", "arbitrary"),
            # Explicit limit: v5e's default scoped VMEM (16 MiB) is smaller than
            # v6e/v7x; give headroom for larger block_k on realistic table sizes.
            vmem_limit_bytes=64 * 1024 * 1024,
        ),
    )(idx, packed_table)
    return out[:n, :repr_dim]


class HeteroNodeEmbeddingPallas:
    """JAX/Pallas equivalent of ml.layers.embedding.HeteroNodeEmbedding."""

    def __init__(self,
                 num_nodes_dict: Dict[str, int],
                 repr_dim: Union[int, Dict[str, int]],
                 mask: Optional[Dict[str, jnp.ndarray]] = None,
                 seed: int = 0,
                 block_k: int = 512):
        self.num_nodes_dict = dict(num_nodes_dict)
        self.repr_dim_dict = (dict(repr_dim) if isinstance(repr_dim, dict)
                              else {nt: repr_dim for nt in num_nodes_dict})
        self.mask_dict = dict(mask) if mask is not None else {}

        key = jax.random.PRNGKey(seed)
        self.tables_f32 = {}     # master weights (nn.Embedding.weight equivalent)
        self.packed_tables = {}  # bf16, mask-premultiplied, zero-padded (K_pad, D_pad)
        self.block_k = {}
        for i, nt in enumerate(sorted(self.num_nodes_dict)):
            num_nodes = self.num_nodes_dict[nt]
            d = self.repr_dim_dict[nt]
            k = jax.random.fold_in(key, i)
            w = jax.random.normal(k, (num_nodes, d), jnp.float32)
            self.tables_f32[nt] = w

            m = self.mask_dict.get(nt)
            w_masked = w if m is None else w * m.astype(jnp.float32)[:, None]

            bk = min(block_k, _round_up(num_nodes, 8))
            k_pad = _round_up(num_nodes, bk)
            d_pad = _round_up(d, 128)
            packed = jnp.zeros((k_pad, d_pad), jnp.bfloat16)
            packed = packed.at[:num_nodes, :d].set(w_masked.astype(jnp.bfloat16))
            self.packed_tables[nt] = packed
            self.block_k[nt] = bk

    def __call__(self, node_idx_dict: Dict[str, jnp.ndarray]) -> Dict[str, jnp.ndarray]:
        return {
            nt: node_embedding_forward(idx, self.packed_tables[nt],
                                       self.repr_dim_dict[nt], self.block_k[nt])
            for nt, idx in node_idx_dict.items()
        }


def _reference_one(idx, table_f32, mask, repr_dim):
    """Plain-JAX reference, using the same bf16 weight rounding the kernel uses."""
    num_nodes = table_f32.shape[0]
    w = table_f32.astype(jnp.bfloat16).astype(jnp.float32)
    idx = idx.astype(jnp.int32)
    safe = jnp.clip(idx, 0, num_nodes - 1)
    valid = jnp.logical_and(idx >= 0, idx < num_nodes)
    if mask is not None:
        valid = jnp.logical_and(valid, mask.astype(bool)[safe])
    rows = w[safe, :repr_dim]
    return jnp.where(valid[:, None], rows, 0.0)


if __name__ == "__main__":
    num_nodes_dict = {"user": 24, "item": 40}
    repr_dim_dict = {"user": 32, "item": 16}
    mask_dict = {"user": (jnp.arange(24) % 2 == 0)}   # only even user-ids exist

    model = HeteroNodeEmbeddingPallas(num_nodes_dict, repr_dim_dict, mask_dict, seed=0)

    key = jax.random.PRNGKey(0)
    ku, ki = jax.random.split(key)
    node_idx_dict = {
        # include out-of-range ids (>= num_nodes) to exercise the zero path
        "user": jax.random.randint(ku, (16,), 0, 32, dtype=jnp.int32),
        "item": jax.random.randint(ki, (8,), 0, 48, dtype=jnp.int32),
    }
    # also exercise the (explicitly chosen) negative-id -> zero semantics
    node_idx_dict["user"] = node_idx_dict["user"].at[0].set(-3)

    out = model(node_idx_dict)
    out = jax.tree_util.tree_map(jax.block_until_ready, out)

    for nt, idx in node_idx_dict.items():
        ref = _reference_one(idx, model.tables_f32[nt], mask_dict.get(nt),
                             repr_dim_dict[nt])
        assert out[nt].shape == (idx.shape[0], repr_dim_dict[nt]), nt
        assert jnp.allclose(out[nt], ref, atol=1e-5), f"mismatch for {nt}"

    print("KERNEL_OK")
</pallas_src>

<mosaic_0001>
module attributes {stable_mosaic.version = 11 : i64} {
  func.func @_embed_kernel(%arg0: i32, %arg1: i32, %arg2: memref<256x1xi32, #tpu.memory_space<vmem>>, %arg3: memref<24x128xbf16, #tpu.memory_space<vmem>>, %arg4: memref<256x128xf32, #tpu.memory_space<vmem>>, %arg5: memref<256x128xf32, #tpu.memory_space<vmem>>) attributes {dimension_semantics = [#tpu.dimension_semantics<parallel>, #tpu.dimension_semantics<arbitrary>], iteration_bounds = array<i64: 1, 1>, scalar_prefetch = 0 : i64, scratch_operands = 1 : i64, tpu.core_type = #tpu.core_type<tc>, window_params = [{transform_indices = @transform_0, window_bounds = array<i64: 256, 1>}, {transform_indices = @transform_1, window_bounds = array<i64: 24, 128>}, {transform_indices = @transform_2, window_bounds = array<i64: 256, 128>}]} {
    %c0_i32 = arith.constant 0 : i32
    %0 = arith.cmpi eq, %arg1, %c0_i32 : i32
    %1 = arith.extui %0 : i1 to i32
    %c0_i32_0 = arith.constant 0 : i32
    %2 = arith.cmpi ne, %1, %c0_i32_0 : i32
    scf.if %2 {
      %cst_10 = arith.constant 0.000000e+00 : f32
      %21 = vector.broadcast %cst_10 : f32 to vector<256x128xf32>
      %c0_11 = arith.constant 0 : index
      %c0_12 = arith.constant 0 : index
      %22 = vector.load %arg5[%c0_11, %c0_12] : memref<256x128xf32, #tpu.memory_space<vmem>>, vector<256x128xf32>
      tpu.vector_store %arg5[%c0_11, %c0_12], %21 {strides = array<i32>} : memref<256x128xf32, #tpu.memory_space<vmem>>, vector<256x128xf32>,
    } else {
    }
    %c0 = arith.constant 0 : index
    %c0_1 = arith.constant 0 : index
    %3 = vector.load %arg2[%c0, %c0_1] : memref<256x1xi32, #tpu.memory_space<vmem>>, vector<256x1xi32>
    %4 = tpu.iota {dimensions = array<i32: 1>} : vector<256x24xi32>
    %c24_i32 = arith.constant 24 : i32
    %5 = arith.muli %arg1, %c24_i32 : i32
    %6 = vector.broadcast %5 : i32 to vector<256x24xi32>
    %7 = arith.addi %4, %6 : vector<256x24xi32>
    %8 = vector.broadcast %3 : vector<256x1xi32> to vector<256x24xi32>
    %9 = arith.cmpi eq, %7, %8 : vector<256x24xi32>
    %10 = arith.extui %9 : vector<256x24xi1> to vector<256x24xi32>
    %11 = arith.sitofp %10 : vector<256x24xi32> to vector<256x24xf32>
    %12 = arith.truncf %11 : vector<256x24xf32> to vector<256x24xbf16>
    %c0_2 = arith.constant 0 : index
    %c0_3 = arith.constant 0 : index
    %13 = vector.load %arg5[%c0_2, %c0_3] : memref<256x128xf32, #tpu.memory_space<vmem>>, vector<256x128xf32>
    %c0_4 = arith.constant 0 : index
    %c0_5 = arith.constant 0 : index
    %14 = vector.load %arg3[%c0_4, %c0_5] : memref<24x128xbf16, #tpu.memory_space<vmem>>, vector<24x128xbf16>
    %cst = arith.constant dense<0.000000e+00> : vector<256x128xf32>
    %15 = tpu.matmul %12, %14, %cst {dimension_numbers = #tpu.dot_dimension_numbers<[1], [0], [0], [1], [0, 0, 1, 1], [], []>} : vector<256x24xbf16>, vector<24x128xbf16>, vector<256x128xf32> -> vector<256x128xf32>
    %16 = arith.addf %13, %15 : vector<256x128xf32>
    %c0_6 = arith.constant 0 : index
    %c0_7 = arith.constant 0 : index
    %17 = vector.load %arg5[%c0_6, %c0_7] : memref<256x128xf32, #tpu.memory_space<vmem>>, vector<256x128xf32>
    tpu.vector_store %arg5[%c0_6, %c0_7], %16 {strides = array<i32>} : memref<256x128xf32, #tpu.memory_space<vmem>>, vector<256x128xf32>,
    %c0_i32_8 = arith.constant 0 : i32
    %18 = arith.cmpi eq, %arg1, %c0_i32_8 : i32
    %19 = arith.extui %18 : i1 to i32
    %c0_i32_9 = arith.constant 0 : i32
    %20 = arith.cmpi ne, %19, %c0_i32_9 : i32
    scf.if %20 {
      %c0_10 = arith.constant 0 : index
      %c0_11 = arith.constant 0 : index
      %21 = vector.load %arg5[%c0_10, %c0_11] : memref<256x128xf32, #tpu.memory_space<vmem>>, vector<256x128xf32>
      %c0_12 = arith.constant 0 : index
      %c0_13 = arith.constant 0 : index
      %22 = vector.load %arg4[%c0_12, %c0_13] : memref<256x128xf32, #tpu.memory_space<vmem>>, vector<256x128xf32>
      tpu.vector_store %arg4[%c0_12, %c0_13], %21 {strides = array<i32>} : memref<256x128xf32, #tpu.memory_space<vmem>>, vector<256x128xf32>,
    } else {
    }
    return
  }
  func.func @transform_0(%arg0: i32, %arg1: i32) -> (i32, i32) {
    %c0_i32 = arith.constant 0 : i32
    %c0_i32_0 = arith.constant 0 : i32
    return %arg0, %c0_i32 : i32, i32
  }
  func.func @transform_1(%arg0: i32, %arg1: i32) -> (i32, i32) {
    %c0_i32 = arith.constant 0 : i32
    %c0_i32_0 = arith.constant 0 : i32
    return %arg1, %c0_i32 : i32, i32
  }
  func.func @transform_2(%arg0: i32, %arg1: i32) -> (i32, i32) {
    %c0_i32 = arith.constant 0 : i32
    %c0_i32_0 = arith.constant 0 : i32
    return %arg0, %c0_i32 : i32, i32
  }
}

</mosaic_0001>

<llo_original>
// kernel: tpu_custom_call.1
$region0: #{tpu_custom_call.1}
  #allocation0 [shape = 'u32[]', space=smem, size = 0x4, offset = 0x4, fixed_abs, tag = 'smem constant byte address 0x4 - core index']
  #allocation1 [shape = 'u32[72,128]{1,0:T(1,128)}', space=vmem, size = 0x9000, scoped, tag = 'internal scratch']
  #allocation2 [shape = 'f32[256,128]{1,0:T(8,128)}', space=vmem, size = 0x20000, scoped, tag = 'scratch operand']
  %s0 = inlined_call_operand.vmem [shape: s32[256,1], index: 0, kind: input, shape index: {}]
  %s1 = inlined_call_operand.vmem [shape: bf16[24,128], index: 1, kind: input, shape index: {}]
  %s2 = inlined_call_operand.hbm [shape: f32[256,128], index: 2, kind: output, shape index: {}]
  %s3 = sld [smem:[#allocation0]]
  $region26: #{tpu_custom_call.1} parent=0
    _
  %s5 = ssub.s32 1, %s3
  %s6 = scalar_select 0, %s5, %s3
  $region1: #{tpu_custom_call.1} parent=0
    #allocation3 [shape = 'u8[131072]{0}', space=vmem, size = 0x20000, scoped, tag = 'output window, operand 0, single buffered']
    #allocation4 [shape = 's32[1]{0}', space=sflag, size = 0x4, scoped, tag = 'scoped memory for tpu_custom_call.1']
    %7 = vsyncpa [#allocation4], 0
    // Predicated region
    $region2: #{tpu_custom_call.1} parent=1 // pred_check
      _
    $region3: #{tpu_custom_call.1} parent=1 // pred_check_branch
      %9 = sbr.rel (0) target = $region5
    $region4: #{tpu_custom_call.1} parent=1 // pred_region
      _
    $region5: #{tpu_custom_call.1} parent=1 // pred_fallthru
      _
    // Predicated region
    $region6: #{tpu_custom_call.1} parent=1 // pred_check
      _
    $region7: #{tpu_custom_call.1} parent=1 // pred_check_branch
      %11 = sbr.rel (0) target = $region9
    $region8: #{tpu_custom_call.1} parent=1 // pred_region
      _
    $region9: #{tpu_custom_call.1} parent=1 // pred_fallthru
      _
    %p13 = scmp.eq.s32.totalorder 0, 0
    // Predicated region
    $region10: #{tpu_custom_call.1} parent=1 // pred_check
      %p14 = pneg %p13
    $region11: #{tpu_custom_call.1} parent=1 // pred_check_branch
      %16 = sbr.rel (%p14) target = $region13
    $region12: #{tpu_custom_call.1} parent=1 // pred_region
      %17 = vst [vmem:[#allocation2] sm:$0xff] 0.0
      %18 = vst [vmem:[#allocation2 + $0x8] sm:$0xff] 0.0
      %19 = vst [vmem:[#allocation2 + $0x10] sm:$0xff] 0.0
      %20 = vst [vmem:[#allocation2 + $0x18] sm:$0xff] 0.0
      %21 = vst [vmem:[#allocation2 + $0x20] sm:$0xff] 0.0
      %22 = vst [vmem:[#allocation2 + $0x28] sm:$0xff] 0.0
      %23 = vst [vmem:[#allocation2 + $0x30] sm:$0xff] 0.0
      %24 = vst [vmem:[#allocation2 + $0x38] sm:$0xff] 0.0
      %25 = vst [vmem:[#allocation2 + $0x40] sm:$0xff] 0.0
      %26 = vst [vmem:[#allocation2 + $0x48] sm:$0xff] 0.0
      %27 = vst [vmem:[#allocation2 + $0x50] sm:$0xff] 0.0
      %28 = vst [vmem:[#allocation2 + $0x58] sm:$0xff] 0.0
      %29 = vst [vmem:[#allocation2 + $0x60] sm:$0xff] 0.0
      %30 = vst [vmem:[#allocation2 + $0x68] sm:$0xff] 0.0
      %31 = vst [vmem:[#allocation2 + $0x70] sm:$0xff] 0.0
      %32 = vst [vmem:[#allocation2 + $0x78] sm:$0xff] 0.0
      %33 = vst [vmem:[#allocation2 + $0x80] sm:$0xff] 0.0
      %34 = vst [vmem:[#allocation2 + $0x88] sm:$0xff] 0.0
      %35 = vst [vmem:[#allocation2 + $0x90] sm:$0xff] 0.0
      %36 = vst [vmem:[#allocation2 + $0x98] sm:$0xff] 0.0
      %37 = vst [vmem:[#allocation2 + $0xa0] sm:$0xff] 0.0
      %38 = vst [vmem:[#allocation2 + $0xa8] sm:$0xff] 0.0
      %39 = vst [vmem:[#allocation2 + $0xb0] sm:$0xff] 0.0
      %40 = vst [vmem:[#allocation2 + $0xb8] sm:$0xff] 0.0
      %41 = vst [vmem:[#allocation2 + $0xc0] sm:$0xff] 0.0
      %42 = vst [vmem:[#allocation2 + $0xc8] sm:$0xff] 0.0
      %43 = vst [vmem:[#allocation2 + $0xd0] sm:$0xff] 0.0
      %44 = vst [vmem:[#allocation2 + $0xd8] sm:$0xff] 0.0
      %45 = vst [vmem:[#allocation2 + $0xe0] sm:$0xff] 0.0
      %46 = vst [vmem:[#allocation2 + $0xe8] sm:$0xff] 0.0
      %47 = vst [vmem:[#allocation2 + $0xf0] sm:$0xff] 0.0
      %48 = vst [vmem:[#allocation2 + $0xf8] sm:$0xff] 0.0
    $region13: #{tpu_custom_call.1} parent=1 // pred_fallthru
      _
    %v49 = vld [vmem:[%s0] sm:$0xff]
    %v50 = vld [vmem:[%s0 + $0x8] sm:$0xff]
    %v51 = vld [vmem:[%s0 + $0x10] sm:$0xff]
    %v52 = vld [vmem:[%s0 + $0x18] sm:$0xff]
    %v53 = vld [vmem:[%s0 + $0x20] sm:$0xff]
    %v54 = vld [vmem:[%s0 + $0x28] sm:$0xff]
    %v55 = vld [vmem:[%s0 + $0x30] sm:$0xff]
    %v56 = vld [vmem:[%s0 + $0x38] sm:$0xff]
    %v57 = vld [vmem:[%s0 + $0x40] sm:$0xff]
    %v58 = vld [vmem:[%s0 + $0x48] sm:$0xff]
    %v59 = vld [vmem:[%s0 + $0x50] sm:$0xff]
    %v60 = vld [vmem:[%s0 + $0x58] sm:$0xff]
    %v61 = vld [vmem:[%s0 + $0x60] sm:$0xff]
    %v62 = vld [vmem:[%s0 + $0x68] sm:$0xff]
    %v63 = vld [vmem:[%s0 + $0x70] sm:$0xff]
    %v64 = vld [vmem:[%s0 + $0x78] sm:$0xff]
    %v65 = vld [vmem:[%s0 + $0x80] sm:$0xff]
    %v66 = vld [vmem:[%s0 + $0x88] sm:$0xff]
    %v67 = vld [vmem:[%s0 + $0x90] sm:$0xff]
    %v68 = vld [vmem:[%s0 + $0x98] sm:$0xff]
    %v69 = vld [vmem:[%s0 + $0xa0] sm:$0xff]
    %v70 = vld [vmem:[%s0 + $0xa8] sm:$0xff]
    %v71 = vld [vmem:[%s0 + $0xb0] sm:$0xff]
    %v72 = vld [vmem:[%s0 + $0xb8] sm:$0xff]
    %v73 = vld [vmem:[%s0 + $0xc0] sm:$0xff]
    %v74 = vld [vmem:[%s0 + $0xc8] sm:$0xff]
    %v75 = vld [vmem:[%s0 + $0xd0] sm:$0xff]
    %v76 = vld [vmem:[%s0 + $0xd8] sm:$0xff]
    %v77 = vld [vmem:[%s0 + $0xe0] sm:$0xff]
    %v78 = vld [vmem:[%s0 + $0xe8] sm:$0xff]
    %v79 = vld [vmem:[%s0 + $0xf0] sm:$0xff]
    %v80 = vld [vmem:[%s0 + $0xf8] sm:$0xff]
    %v81 = vlaneseq
    %v82 = vand.u32 %v81, 127
    %s83 = smul.u32 0, 24
    %v84 = vstv %s83
    %v85 = vadd.s32 %v82, %v84
    %86 = vset.pattern.permute.xlu0 0
    %87 = vperm.xlu0 %86, %v49
    %v88 = vpop.permute.xlu0 %87
    %89 = vset.pattern.permute.xlu0 0
    %90 = vperm.xlu0 %89, %v50
    %v91 = vpop.permute.xlu0 %90
    %92 = vset.pattern.permute.xlu0 0
    %93 = vperm.xlu0 %92, %v51
    %v94 = vpop.permute.xlu0 %93
    %95 = vset.pattern.permute.xlu0 0
    %96 = vperm.xlu0 %95, %v52
    %v97 = vpop.permute.xlu0 %96
    %98 = vset.pattern.permute.xlu0 0
    %99 = vperm.xlu0 %98, %v53
    %v100 = vpop.permute.xlu0 %99
    %101 = vset.pattern.permute.xlu0 0
    %102 = vperm.xlu0 %101, %v54
    %v103 = vpop.permute.xlu0 %102
    %104 = vset.pattern.permute.xlu0 0
    %105 = vperm.xlu0 %104, %v55
    %v106 = vpop.permute.xlu0 %105
    %107 = vset.pattern.permute.xlu0 0
    %108 = vperm.xlu0 %107, %v56
    %v109 = vpop.permute.xlu0 %108
    %110 = vset.pattern.permute.xlu0 0
    %111 = vperm.xlu0 %110, %v57
    %v112 = vpop.permute.xlu0 %111
    %113 = vset.pattern.permute.xlu0 0
    %114 = vperm.xlu0 %113, %v58
    %v115 = vpop.permute.xlu0 %114
    %116 = vset.pattern.permute.xlu0 0
    %117 = vperm.xlu0 %116, %v59
    %v118 = vpop.permute.xlu0 %117
    %119 = vset.pattern.permute.xlu0 0
    %120 = vperm.xlu0 %119, %v60
    %v121 = vpop.permute.xlu0 %120
    %122 = vset.pattern.permute.xlu0 0
    %123 = vperm.xlu0 %122, %v61
    %v124 = vpop.permute.xlu0 %123
    %125 = vset.pattern.permute.xlu0 0
    %126 = vperm.xlu0 %125, %v62
    %v127 = vpop.permute.xlu0 %126
    %128 = vset.pattern.permute.xlu0 0
    %129 = vperm.xlu0 %128, %v63
    %v130 = vpop.permute.xlu0 %129
    %131 = vset.pattern.permute.xlu0 0
    %132 = vperm.xlu0 %131, %v64
    %v133 = vpop.permute.xlu0 %132
    %134 = vset.pattern.permute.xlu0 0
    %135 = vperm.xlu0 %134, %v65
    %v136 = vpop.permute.xlu0 %135
    %137 = vset.pattern.permute.xlu0 0
    %138 = vperm.xlu0 %137, %v66
    %v139 = vpop.permute.xlu0 %138
    %140 = vset.pattern.permute.xlu0 0
    %141 = vperm.xlu0 %140, %v67
    %v142 = vpop.permute.xlu0 %141
    %143 = vset.pattern.permute.xlu0 0
    %144 = vperm.xlu0 %143, %v68
    %v145 = vpop.permute.xlu0 %144
    %146 = vset.pattern.permute.xlu0 0
    %147 = vperm.xlu0 %146, %v69
    %v148 = vpop.permute.xlu0 %147
    %149 = vset.pattern.permute.xlu0 0
    %150 = vperm.xlu0 %149, %v70
    %v151 = vpop.permute.xlu0 %150
    %152 = vset.pattern.permute.xlu0 0
    %153 = vperm.xlu0 %152, %v71
    %v154 = vpop.permute.xlu0 %153
    %155 = vset.pattern.permute.xlu0 0
    %156 = vperm.xlu0 %155, %v72
    %v157 = vpop.permute.xlu0 %156
    %158 = vset.pattern.permute.xlu0 0
    %159 = vperm.xlu0 %158, %v73
    %v160 = vpop.permute.xlu0 %159
    %161 = vset.pattern.permute.xlu0 0
    %162 = vperm.xlu0 %161, %v74
    %v163 = vpop.permute.xlu0 %162
    %164 = vset.pattern.permute.xlu0 0
    %165 = vperm.xlu0 %164, %v75
    %v166 = vpop.permute.xlu0 %165
    %167 = vset.pattern.permute.xlu0 0
    %168 = vperm.xlu0 %167, %v76
    %v169 = vpop.permute.xlu0 %168
    %170 = vset.pattern.permute.xlu0 0
    %171 = vperm.xlu0 %170, %v77
    %v172 = vpop.permute.xlu0 %171
    %173 = vset.pattern.permute.xlu0 0
    %174 = vperm.xlu0 %173, %v78
    %v175 = vpop.permute.xlu0 %174
    %176 = vset.pattern.permute.xlu0 0
    %177 = vperm.xlu0 %176, %v79
    %v178 = vpop.permute.xlu0 %177
    %179 = vset.pattern.permute.xlu0 0
    %180 = vperm.xlu0 %179, %v80
    %v181 = vpop.permute.xlu0 %180
    %vm182 = vcmp.eq.s32.totalorder %v85, %v88
    %vm183 = vcmp.eq.s32.totalorder %v85, %v91
    %vm184 = vcmp.eq.s32.totalorder %v85, %v94
    %vm185 = vcmp.eq.s32.totalorder %v85, %v97
    %vm186 = vcmp.eq.s32.totalorder %v85, %v100
    %vm187 = vcmp.eq.s32.totalorder %v85, %v103
    %vm188 = vcmp.eq.s32.totalorder %v85, %v106
    %vm189 = vcmp.eq.s32.totalorder %v85, %v109
    %vm190 = vcmp.eq.s32.totalorder %v85, %v112
    %vm191 = vcmp.eq.s32.totalorder %v85, %v115
    %vm192 = vcmp.eq.s32.totalorder %v85, %v118
    %vm193 = vcmp.eq.s32.totalorder %v85, %v121
    %vm194 = vcmp.eq.s32.totalorder %v85, %v124
    %vm195 = vcmp.eq.s32.totalorder %v85, %v127
    %vm196 = vcmp.eq.s32.totalorder %v85, %v130
    %vm197 = vcmp.eq.s32.totalorder %v85, %v133
    %vm198 = vcmp.eq.s32.totalorder %v85, %v136
    %vm199 = vcmp.eq.s32.totalorder %v85, %v139
    %vm200 = vcmp.eq.s32.totalorder %v85, %v142
    %vm201 = vcmp.eq.s32.totalorder %v85, %v145
    %vm202 = vcmp.eq.s32.totalorder %v85, %v148
    %vm203 = vcmp.eq.s32.totalorder %v85, %v151
    %vm204 = vcmp.eq.s32.totalorder %v85, %v154
    %vm205 = vcmp.eq.s32.totalorder %v85, %v157
    %vm206 = vcmp.eq.s32.totalorder %v85, %v160
    %vm207 = vcmp.eq.s32.totalorder %v85, %v163
    %vm208 = vcmp.eq.s32.totalorder %v85, %v166
    %vm209 = vcmp.eq.s32.totalorder %v85, %v169
    %vm210 = vcmp.eq.s32.totalorder %v85, %v172
    %vm211 = vcmp.eq.s32.totalorder %v85, %v175
    %vm212 = vcmp.eq.s32.totalorder %v85, %v178
    %vm213 = vcmp.eq.s32.totalorder %v85, %v181
    %v214 = vsel %vm182, 1, 0
    %v215 = vsel %vm183, 1, 0
    %v216 = vsel %vm184, 1, 0
    %v217 = vsel %vm185, 1, 0
    %v218 = vsel %vm186, 1, 0
    %v219 = vsel %vm187, 1, 0
    %v220 = vsel %vm188, 1, 0
    %v221 = vsel %vm189, 1, 0
    %v222 = vsel %vm190, 1, 0
    %v223 = vsel %vm191, 1, 0
    %v224 = vsel %vm192, 1, 0
    %v225 = vsel %vm193, 1, 0
    %v226 = vsel %vm194, 1, 0
    %v227 = vsel %vm195, 1, 0
    %v228 = vsel %vm196, 1, 0
    %v229 = vsel %vm197, 1, 0
    %v230 = vsel %vm198, 1, 0
    %v231 = vsel %vm199, 1, 0
    %v232 = vsel %vm200, 1, 0
    %v233 = vsel %vm201, 1, 0
    %v234 = vsel %vm202, 1, 0
    %v235 = vsel %vm203, 1, 0
    %v236 = vsel %vm204, 1, 0
    %v237 = vsel %vm205, 1, 0
    %v238 = vsel %vm206, 1, 0
    %v239 = vsel %vm207, 1, 0
    %v240 = vsel %vm208, 1, 0
    %v241 = vsel %vm209, 1, 0
    %v242 = vsel %vm210, 1, 0
    %v243 = vsel %vm211, 1, 0
    %v244 = vsel %vm212, 1, 0
    %v245 = vsel %vm213, 1, 0
    %v246 = vcvt.s32.f32 %v214
    %v247 = vcvt.s32.f32 %v215
    %v248 = vcvt.s32.f32 %v216
    %v249 = vcvt.s32.f32 %v217
    %v250 = vcvt.s32.f32 %v218
    %v251 = vcvt.s32.f32 %v219
    %v252 = vcvt.s32.f32 %v220
    %v253 = vcvt.s32.f32 %v221
    %v254 = vcvt.s32.f32 %v222
    %v255 = vcvt.s32.f32 %v223
    %v256 = vcvt.s32.f32 %v224
    %v257 = vcvt.s32.f32 %v225
    %v258 = vcvt.s32.f32 %v226
    %v259 = vcvt.s32.f32 %v227
    %v260 = vcvt.s32.f32 %v228
    %v261 = vcvt.s32.f32 %v229
    %v262 = vcvt.s32.f32 %v230
    %v263 = vcvt.s32.f32 %v231
    %v264 = vcvt.s32.f32 %v232
    %v265 = vcvt.s32.f32 %v233
    %v266 = vcvt.s32.f32 %v234
    %v267 = vcvt.s32.f32 %v235
    %v268 = vcvt.s32.f32 %v236
    %v269 = vcvt.s32.f32 %v237
    %v270 = vcvt.s32.f32 %v238
    %v271 = vcvt.s32.f32 %v239
    %v272 = vcvt.s32.f32 %v240
    %v273 = vcvt.s32.f32 %v241
    %v274 = vcvt.s32.f32 %v242
    %v275 = vcvt.s32.f32 %v243
    %v276 = vcvt.s32.f32 %v244
    %v277 = vcvt.s32.f32 %v245
    %v278 = vpack.c.bf16 %v247, %v246
    %v279 = vpack.c.bf16 %v249, %v248
    %v280 = vpack.c.bf16 %v251, %v250
    %v281 = vpack.c.bf16 %v253, %v252
    %v282 = vpack.c.bf16 %v255, %v254
    %v283 = vpack.c.bf16 %v257, %v256
    %v284 = vpack.c.bf16 %v259, %v258
    %v285 = vpack.c.bf16 %v261, %v260
    %v286 = vpack.c.bf16 %v263, %v262
    %v287 = vpack.c.bf16 %v265, %v264
    %v288 = vpack.c.bf16 %v267, %v266
    %v289 = vpack.c.bf16 %v269, %v268
    %v290 = vpack.c.bf16 %v271, %v270
    %v291 = vpack.c.bf16 %v273, %v272
    %v292 = vpack.c.bf16 %v275, %v274
    %v293 = vpack.c.bf16 %v277, %v276
    %v294 = vld [vmem:[#allocation2] sm:$0xff]
    %v295 = vld [vmem:[#allocation2 + $0x8] sm:$0xff]
    %v296 = vld [vmem:[#allocation2 + $0x10] sm:$0xff]
    %v297 = vld [vmem:[#allocation2 + $0x18] sm:$0xff]
    %v298 = vld [vmem:[#allocation2 + $0x20] sm:$0xff]
    %v299 = vld [vmem:[#allocation2 + $0x28] sm:$0xff]
    %v300 = vld [vmem:[#allocation2 + $0x30] sm:$0xff]
    %v301 = vld [vmem:[#allocation2 + $0x38] sm:$0xff]
    %v302 = vld [vmem:[#allocation2 + $0x40] sm:$0xff]
    %v303 = vld [vmem:[#allocation2 + $0x48] sm:$0xff]
    %v304 = vld [vmem:[#allocation2 + $0x50] sm:$0xff]
    %v305 = vld [vmem:[#allocation2 + $0x58] sm:$0xff]
    %v306 = vld [vmem:[#allocation2 + $0x60] sm:$0xff]
    %v307 = vld [vmem:[#allocation2 + $0x68] sm:$0xff]
    %v308 = vld [vmem:[#allocation2 + $0x70] sm:$0xff]
    %v309 = vld [vmem:[#allocation2 + $0x78] sm:$0xff]
    %v310 = vld [vmem:[#allocation2 + $0x80] sm:$0xff]
    %v311 = vld [vmem:[#allocation2 + $0x88] sm:$0xff]
    %v312 = vld [vmem:[#allocation2 + $0x90] sm:$0xff]
    %v313 = vld [vmem:[#allocation2 + $0x98] sm:$0xff]
    %v314 = vld [vmem:[#allocation2 + $0xa0] sm:$0xff]
    %v315 = vld [vmem:[#allocation2 + $0xa8] sm:$0xff]
    %v316 = vld [vmem:[#allocation2 + $0xb0] sm:$0xff]
    %v317 = vld [vmem:[#allocation2 + $0xb8] sm:$0xff]
    %v318 = vld [vmem:[#allocation2 + $0xc0] sm:$0xff]
    %v319 = vld [vmem:[#allocation2 + $0xc8] sm:$0xff]
    %v320 = vld [vmem:[#allocation2 + $0xd0] sm:$0xff]
    %v321 = vld [vmem:[#allocation2 + $0xd8] sm:$0xff]
    %v322 = vld [vmem:[#allocation2 + $0xe0] sm:$0xff]
    %v323 = vld [vmem:[#allocation2 + $0xe8] sm:$0xff]
    %v324 = vld [vmem:[#allocation2 + $0xf0] sm:$0xff]
    %v325 = vld [vmem:[#allocation2 + $0xf8] sm:$0xff]
    %v326 = vld [vmem:[%s1] sm:$0xf]
    %v327 = vld [vmem:[%s1 + $0x4] sm:$0xf]
    %v328 = vld [vmem:[%s1 + $0x8] sm:$0xf]
    %v332 = vunpack.c.l.b16 %v326
    %v333 = vunpack.c.l.b16 %v327
    %v334 = vunpack.c.l.b16 %v328
    %v335 = vpack.c.b16 %v333, %v332
    %v336 = vpack.c.b16 %v334, %v334
    %vm338 = vcmask 195584
    %v340 = vsel %vm338, %v278, 0
    %v343 = vsel %vm338, %v279, 0
    %v346 = vsel %vm338, %v280, 0
    %v349 = vsel %vm338, %v281, 0
    %v352 = vsel %vm338, %v282, 0
    %v355 = vsel %vm338, %v283, 0
    %v358 = vsel %vm338, %v284, 0
    %v361 = vsel %vm338, %v285, 0
    %v364 = vsel %vm338, %v286, 0
    %v367 = vsel %vm338, %v287, 0
    %v370 = vsel %vm338, %v288, 0
    %v373 = vsel %vm338, %v289, 0
    %v376 = vsel %vm338, %v290, 0
    %v379 = vsel %vm338, %v291, 0
    %v382 = vsel %vm338, %v292, 0
    %v385 = vsel %vm338, %v293, 0
    %vm387 = vcmask 1043456
    %v389 = vsel %vm387, %v336, 0
    %391 = vmatpush.bf16.msra.mxu0 0
    %392 = vmatpush.bf16.msra.mxu0 0
    %393 = vmatpush.bf16.msra.mxu0 0
    %394 = vmatpush.bf16.msra.mxu0 0
    %395 = vmatpush.bf16.msra.mxu0 0
    %396 = vmatpush.bf16.msra.mxu0 0
    %397 = vmatpush.bf16.msra.mxu0 %v389
    %398 = vmatpush.bf16.msra.mxu0 %v335
    %399 = vmatmul.bf16.gmra.mxu0 %v340
    %v400 = vpop.f32.mrf.mxu0
    %v401 = vadd.f32 0.0, %v400
    %v402 = vpop.f32.mrf.mxu0
    %v403 = vadd.f32 0.0, %v402
    %404 = vmatmul.bf16.gmra.mxu0 %v343
    %v405 = vpop.f32.mrf.mxu0
    %v406 = vadd.f32 0.0, %v405
    %v407 = vpop.f32.mrf.mxu0
    %v408 = vadd.f32 0.0, %v407
    %409 = vmatmul.bf16.gmra.mxu0 %v346
    %v410 = vpop.f32.mrf.mxu0
    %v411 = vadd.f32 0.0, %v410
    %v412 = vpop.f32.mrf.mxu0
    %v413 = vadd.f32 0.0, %v412
    %414 = vmatmul.bf16.gmra.mxu0 %v349
    %v415 = vpop.f32.mrf.mxu0
    %v416 = vadd.f32 0.0, %v415
    %v417 = vpop.f32.mrf.mxu0
    %v418 = vadd.f32 0.0, %v417
    %419 = vmatmul.bf16.gmra.mxu0 %v352
    %v420 = vpop.f32.mrf.mxu0
    %v421 = vadd.f32 0.0, %v420
    %v422 = vpop.f32.mrf.mxu0
    %v423 = vadd.f32 0.0, %v422
    %424 = vmatmul.bf16.gmra.mxu0 %v355
    %v425 = vpop.f32.mrf.mxu0
    %v426 = vadd.f32 0.0, %v425
    %v427 = vpop.f32.mrf.mxu0
    %v428 = vadd.f32 0.0, %v427
    %429 = vmatmul.bf16.gmra.mxu0 %v358
    %v430 = vpop.f32.mrf.mxu0
    %v431 = vadd.f32 0.0, %v430
    %v432 = vpop.f32.mrf.mxu0
    %v433 = vadd.f32 0.0, %v432
    %434 = vmatmul.bf16.gmra.mxu0 %v361
    %v435 = vpop.f32.mrf.mxu0
    %v436 = vadd.f32 0.0, %v435
    %v437 = vpop.f32.mrf.mxu0
    %v438 = vadd.f32 0.0, %v437
    %439 = vmatmul.bf16.gmra.mxu0 %v364
    %v440 = vpop.f32.mrf.mxu0
    %v441 = vadd.f32 0.0, %v440
    %v442 = vpop.f32.mrf.mxu0
    %v443 = vadd.f32 0.0, %v442
    %444 = vmatmul.bf16.gmra.mxu0 %v367
    %v445 = vpop.f32.mrf.mxu0
    %v446 = vadd.f32 0.0, %v445
    %v447 = vpop.f32.mrf.mxu0
    %v448 = vadd.f32 0.0, %v447
    %449 = vmatmul.bf16.gmra.mxu0 %v370
    %v450 = vpop.f32.mrf.mxu0
    %v451 = vadd.f32 0.0, %v450
    %v452 = vpop.f32.mrf.mxu0
    %v453 = vadd.f32 0.0, %v452
    %454 = vmatmul.bf16.gmra.mxu0 %v373
    %v455 = vpop.f32.mrf.mxu0
    %v456 = vadd.f32 0.0, %v455
    %v457 = vpop.f32.mrf.mxu0
    %v458 = vadd.f32 0.0, %v457
    %459 = vmatmul.bf16.gmra.mxu0 %v376
    %v460 = vpop.f32.mrf.mxu0
    %v461 = vadd.f32 0.0, %v460
    %v462 = vpop.f32.mrf.mxu0
    %v463 = vadd.f32 0.0, %v462
    %464 = vmatmul.bf16.gmra.mxu0 %v379
    %v465 = vpop.f32.mrf.mxu0
    %v466 = vadd.f32 0.0, %v465
    %v467 = vpop.f32.mrf.mxu0
    %v468 = vadd.f32 0.0, %v467
    %469 = vmatmul.bf16.gmra.mxu0 %v382
    %v470 = vpop.f32.mrf.mxu0
    %v471 = vadd.f32 0.0, %v470
    %v472 = vpop.f32.mrf.mxu0
    %v473 = vadd.f32 0.0, %v472
    %474 = vmatmul.bf16.gmra.mxu0 %v385
    %v475 = vpop.f32.mrf.mxu0
    %v476 = vadd.f32 0.0, %v475
    %v477 = vpop.f32.mrf.mxu0
    %v478 = vadd.f32 0.0, %v477
    %479 = vdwg.mxu0
    %v480 = vadd.f32 %v294, %v401
    %v481 = vadd.f32 %v295, %v403
    %v482 = vadd.f32 %v296, %v406
    %v483 = vadd.f32 %v297, %v408
    %v484 = vadd.f32 %v298, %v411
    %v485 = vadd.f32 %v299, %v413
    %v486 = vadd.f32 %v300, %v416
    %v487 = vadd.f32 %v301, %v418
    %v488 = vadd.f32 %v302, %v421
    %v489 = vadd.f32 %v303, %v423
    %v490 = vadd.f32 %v304, %v426
    %v491 = vadd.f32 %v305, %v428
    %v492 = vadd.f32 %v306, %v431
    %v493 = vadd.f32 %v307, %v433
    %v494 = vadd.f32 %v308, %v436
    %v495 = vadd.f32 %v309, %v438
    %v496 = vadd.f32 %v310, %v441
    %v497 = vadd.f32 %v311, %v443
    %v498 = vadd.f32 %v312, %v446
    %v499 = vadd.f32 %v313, %v448
    %v500 = vadd.f32 %v314, %v451
    %v501 = vadd.f32 %v315, %v453
    %v502 = vadd.f32 %v316, %v456
    %v503 = vadd.f32 %v317, %v458
    %v504 = vadd.f32 %v318, %v461
    %v505 = vadd.f32 %v319, %v463
    %v506 = vadd.f32 %v320, %v466
    %v507 = vadd.f32 %v321, %v468
    %v508 = vadd.f32 %v322, %v471
    %v509 = vadd.f32 %v323, %v473
    %v510 = vadd.f32 %v324, %v476
    %v511 = vadd.f32 %v325, %v478
    %512 = vst [vmem:[#allocation2] sm:$0xff] %v480
    %513 = vst [vmem:[#allocation2 + $0x8] sm:$0xff] %v481
    %514 = vst [vmem:[#allocation2 + $0x10] sm:$0xff] %v482
    %515 = vst [vmem:[#allocation2 + $0x18] sm:$0xff] %v483
    %516 = vst [vmem:[#allocation2 + $0x20] sm:$0xff] %v484
    %517 = vst [vmem:[#allocation2 + $0x28] sm:$0xff] %v485
    %518 = vst [vmem:[#allocation2 + $0x30] sm:$0xff] %v486
    %519 = vst [vmem:[#allocation2 + $0x38] sm:$0xff] %v487
    %520 = vst [vmem:[#allocation2 + $0x40] sm:$0xff] %v488
    %521 = vst [vmem:[#allocation2 + $0x48] sm:$0xff] %v489
    %522 = vst [vmem:[#allocation2 + $0x50] sm:$0xff] %v490
    %523 = vst [vmem:[#allocation2 + $0x58] sm:$0xff] %v491
    %524 = vst [vmem:[#allocation2 + $0x60] sm:$0xff] %v492
    %525 = vst [vmem:[#allocation2 + $0x68] sm:$0xff] %v493
    %526 = vst [vmem:[#allocation2 + $0x70] sm:$0xff] %v494
    %527 = vst [vmem:[#allocation2 + $0x78] sm:$0xff] %v495
    %528 = vst [vmem:[#allocation2 + $0x80] sm:$0xff] %v496
    %529 = vst [vmem:[#allocation2 + $0x88] sm:$0xff] %v497
    %530 = vst [vmem:[#allocation2 + $0x90] sm:$0xff] %v498
    %531 = vst [vmem:[#allocation2 + $0x98] sm:$0xff] %v499
    %532 = vst [vmem:[#allocation2 + $0xa0] sm:$0xff] %v500
    %533 = vst [vmem:[#allocation2 + $0xa8] sm:$0xff] %v501
    %534 = vst [vmem:[#allocation2 + $0xb0] sm:$0xff] %v502
    %535 = vst [vmem:[#allocation2 + $0xb8] sm:$0xff] %v503
    %536 = vst [vmem:[#allocation2 + $0xc0] sm:$0xff] %v504
    %537 = vst [vmem:[#allocation2 + $0xc8] sm:$0xff] %v505
    %538 = vst [vmem:[#allocation2 + $0xd0] sm:$0xff] %v506
    %539 = vst [vmem:[#allocation2 + $0xd8] sm:$0xff] %v507
    %540 = vst [vmem:[#allocation2 + $0xe0] sm:$0xff] %v508
    %541 = vst [vmem:[#allocation2 + $0xe8] sm:$0xff] %v509
    %542 = vst [vmem:[#allocation2 + $0xf0] sm:$0xff] %v510
    %543 = vst [vmem:[#allocation2 + $0xf8] sm:$0xff] %v511
    // Predicated region
    $region14: #{tpu_custom_call.1} parent=1 // pred_check
      %p544 = pneg %p13
    $region15: #{tpu_custom_call.1} parent=1 // pred_check_branch
      %546 = sbr.rel (%p544) target = $region17
    $region16: #{tpu_custom_call.1} parent=1 // pred_region
      %v547 = vld [vmem:[#allocation2] sm:$0xff]
      %v548 = vld [vmem:[#allocation2 + $0x8] sm:$0xff]
      %v549 = vld [vmem:[#allocation2 + $0x10] sm:$0xff]
      %v550 = vld [vmem:[#allocation2 + $0x18] sm:$0xff]
      %v551 = vld [vmem:[#allocation2 + $0x20] sm:$0xff]
      %v552 = vld [vmem:[#allocation2 + $0x28] sm:$0xff]
      %v553 = vld [vmem:[#allocation2 + $0x30] sm:$0xff]
      %v554 = vld [vmem:[#allocation2 + $0x38] sm:$0xff]
      %v555 = vld [vmem:[#allocation2 + $0x40] sm:$0xff]
      %v556 = vld [vmem:[#allocation2 + $0x48] sm:$0xff]
      %v557 = vld [vmem:[#allocation2 + $0x50] sm:$0xff]
      %v558 = vld [vmem:[#allocation2 + $0x58] sm:$0xff]
      %v559 = vld [vmem:[#allocation2 + $0x60] sm:$0xff]
      %v560 = vld [vmem:[#allocation2 + $0x68] sm:$0xff]
      %v561 = vld [vmem:[#allocation2 + $0x70] sm:$0xff]
      %v562 = vld [vmem:[#allocation2 + $0x78] sm:$0xff]
      %v563 = vld [vmem:[#allocation2 + $0x80] sm:$0xff]
      %v564 = vld [vmem:[#allocation2 + $0x88] sm:$0xff]
      %v565 = vld [vmem:[#allocation2 + $0x90] sm:$0xff]
      %v566 = vld [vmem:[#allocation2 + $0x98] sm:$0xff]
      %v567 = vld [vmem:[#allocation2 + $0xa0] sm:$0xff]
      %v568 = vld [vmem:[#allocation2 + $0xa8] sm:$0xff]
      %v569 = vld [vmem:[#allocation2 + $0xb0] sm:$0xff]
      %v570 = vld [vmem:[#allocation2 + $0xb8] sm:$0xff]
      %v571 = vld [vmem:[#allocation2 + $0xc0] sm:$0xff]
      %v572 = vld [vmem:[#allocation2 + $0xc8] sm:$0xff]
      %v573 = vld [vmem:[#allocation2 + $0xd0] sm:$0xff]
      %v574 = vld [vmem:[#allocation2 + $0xd8] sm:$0xff]
      %v575 = vld [vmem:[#allocation2 + $0xe0] sm:$0xff]
      %v576 = vld [vmem:[#allocation2 + $0xe8] sm:$0xff]
      %v577 = vld [vmem:[#allocation2 + $0xf0] sm:$0xff]
      %v578 = vld [vmem:[#allocation2 + $0xf8] sm:$0xff]
      %579 = vst [vmem:[#allocation3] sm:$0xff] %v547
      %580 = vst [vmem:[#allocation3 + $0x8] sm:$0xff] %v548
      %581 = vst [vmem:[#allocation3 + $0x10] sm:$0xff] %v549
      %582 = vst [vmem:[#allocation3 + $0x18] sm:$0xff] %v550
      %583 = vst [vmem:[#allocation3 + $0x20] sm:$0xff] %v551
      %584 = vst [vmem:[#allocation3 + $0x28] sm:$0xff] %v552
      %585 = vst [vmem:[#allocation3 + $0x30] sm:$0xff] %v553
      %586 = vst [vmem:[#allocation3 + $0x38] sm:$0xff] %v554
      %587 = vst [vmem:[#allocation3 + $0x40] sm:$0xff] %v555
      %588 = vst [vmem:[#allocation3 + $0x48] sm:$0xff] %v556
      %589 = vst [vmem:[#allocation3 + $0x50] sm:$0xff] %v557
      %590 = vst [vmem:[#allocation3 + $0x58] sm:$0xff] %v558
      %591 = vst [vmem:[#allocation3 + $0x60] sm:$0xff] %v559
      %592 = vst [vmem:[#allocation3 + $0x68] sm:$0xff] %v560
      %593 = vst [vmem:[#allocation3 + $0x70] sm:$0xff] %v561
      %594 = vst [vmem:[#allocation3 + $0x78] sm:$0xff] %v562
      %595 = vst [vmem:[#allocation3 + $0x80] sm:$0xff] %v563
      %596 = vst [vmem:[#allocation3 + $0x88] sm:$0xff] %v564
      %597 = vst [vmem:[#allocation3 + $0x90] sm:$0xff] %v565
      %598 = vst [vmem:[#allocation3 + $0x98] sm:$0xff] %v566
      %599 = vst [vmem:[#allocation3 + $0xa0] sm:$0xff] %v567
      %600 = vst [vmem:[#allocation3 + $0xa8] sm:$0xff] %v568
      %601 = vst [vmem:[#allocation3 + $0xb0] sm:$0xff] %v569
      %602 = vst [vmem:[#allocation3 + $0xb8] sm:$0xff] %v570
      %603 = vst [vmem:[#allocation3 + $0xc0] sm:$0xff] %v571
      %604 = vst [vmem:[#allocation3 + $0xc8] sm:$0xff] %v572
      %605 = vst [vmem:[#allocation3 + $0xd0] sm:$0xff] %v573
      %606 = vst [vmem:[#allocation3 + $0xd8] sm:$0xff] %v574
      %607 = vst [vmem:[#allocation3 + $0xe0] sm:$0xff] %v575
      %608 = vst [vmem:[#allocation3 + $0xe8] sm:$0xff] %v576
      %609 = vst [vmem:[#allocation3 + $0xf0] sm:$0xff] %v577
      %610 = vst [vmem:[#allocation3 + $0xf8] sm:$0xff] %v578
    $region17: #{tpu_custom_call.1} parent=1 // pred_fallthru
      _
    // Predicated region
    $region18: #{tpu_custom_call.1} parent=1 // pred_check
      _
    $region19: #{tpu_custom_call.1} parent=1 // pred_check_branch
      %612 = sbr.rel (0) target = $region21
    $region20: #{tpu_custom_call.1} parent=1 // pred_region
      %614 = vsyncadd [#allocation4], 0
      %s615 = sshll.u32 [#allocation3], 4
      %s616 = int_to_ptr.vmem [resolvable:$true] %s615
      %s617 = sshll.u32 %s2, 4
      %s618 = int_to_ptr.hbm [resolvable:$true] %s617
      %623 = dma.vmem_to_hbm [thread:$0]  %s616, 4096, %s618, [#allocation4], 128, 128, 8
    $region21: #{tpu_custom_call.1} parent=1 // pred_fallthru
      _
    // Predicated region
    $region22: #{tpu_custom_call.1} parent=1 // pred_check
      _
    $region23: #{tpu_custom_call.1} parent=1 // pred_check_branch
      %625 = sbr.rel (0) target = $region25
    $region24: #{tpu_custom_call.1} parent=1 // pred_region
      %627 = dma.done [#allocation4], 4096
    $region25: #{tpu_custom_call.1} parent=1 // pred_fallthru
      _
    %628 = vsyncpa [#allocation4], 1

</llo_original>
